<compile_context>
chip_gen: v6e
topology: v6e:2x2x1
jax: 0.10.0
libtpu: 0.0.40
codegen_flags: <defaults>
</compile_context>

<pallas_src>
import math

import jax
import jax.numpy as jnp
from jax.experimental import pallas as pl
from jax.experimental.pallas import tpu as pltpu


def sinusoidal_positional_encoding(seq_len: int, d_model: int):
    """Matches the PyTorch buffer: pe[:, 0::2] = sin, pe[:, 1::2] = cos."""
    position = jnp.arange(seq_len, dtype=jnp.float32)[:, None]
    div_term = jnp.exp(jnp.arange(0, d_model, 2, dtype=jnp.float32)
                       * (-math.log(10000.0) / d_model))
    pe = jnp.zeros((seq_len, d_model), jnp.float32)
    pe = pe.at[:, 0::2].set(jnp.sin(position * div_term))
    pe = pe.at[:, 1::2].set(jnp.cos(position * div_term))
    return pe


def transformer_embedding(ids, emb_table, pe, *, block_s=128):
    """ids: (B, S) int32 token ids; emb_table: (vocab, d_model);
       pe: (S, d_model) positional-encoding buffer.
       Returns (B, S, d_model) = emb_table[ids] * sqrt(d_model) + pe  (eval-mode dropout)."""
    B, S = ids.shape
    vocab, d_model = emb_table.shape
    scale = math.sqrt(d_model)

    # Tokens per grid step; pad S so the grid is exact (ragged last block handled
    # by padding + final slice instead of shrinking the tile).
    ts = min(block_s, S)
    s_pad = pl.cdiv(S, ts) * ts
    if s_pad != S:
        ids = jnp.pad(ids, ((0, 0), (0, s_pad - S)))      # pad with (valid) token id 0
        pe = jnp.pad(pe, ((0, s_pad - S), (0, 0)))
    ids = ids.astype(jnp.int32)
    pe = pe.astype(jnp.float32)

    def kernel(ids_smem, emb_hbm, pe_ref, o_ref, gather_buf, sem):
        b = pl.program_id(0)
        sb = pl.program_id(1)
        base = sb * ts

        # Issue all embedding-row gather DMAs for this token block, then wait for all.
        for j in range(ts):
            tok = ids_smem[b, base + j]
            pltpu.make_async_copy(emb_hbm.at[pl.ds(tok, 1), :],
                                  gather_buf.at[pl.ds(j, 1), :],
                                  sem).start()
        for j in range(ts):
            pltpu.make_async_copy(emb_hbm.at[pl.ds(0, 1), :],   # same-sized descriptor
                                  gather_buf.at[pl.ds(j, 1), :],
                                  sem).wait()

        emb = gather_buf[...].astype(jnp.float32)
        out = emb * scale + pe_ref[...]
        # dropout: identity (eval mode)
        o_ref[...] = out[None].astype(o_ref.dtype)

    itemsize = jnp.dtype(emb_table.dtype).itemsize
    cost = pl.CostEstimate(
        flops=2 * B * s_pad * d_model,
        transcendentals=0,
        bytes_accessed=B * s_pad * d_model * (2 * itemsize + 4) + B * s_pad * 4,
    )

    out = pl.pallas_call(
        kernel,
        out_shape=jax.ShapeDtypeStruct((B, s_pad, d_model), emb_table.dtype),
        grid_spec=pltpu.PrefetchScalarGridSpec(
            num_scalar_prefetch=1,
            grid=(B, s_pad // ts),
            in_specs=[
                pl.BlockSpec(memory_space=pl.ANY),                        # emb table (HBM)
                pl.BlockSpec((ts, d_model), lambda b, sb, ids: (sb, 0)),  # pe block
            ],
            out_specs=pl.BlockSpec((1, ts, d_model),
                                   lambda b, sb, ids: (b, sb, 0)),
            scratch_shapes=[
                pltpu.VMEM((ts, d_model), emb_table.dtype),  # gathered rows
                pltpu.SemaphoreType.DMA,                     # single sem, N waits
            ],
        ),
        compiler_params=pltpu.CompilerParams(
            dimension_semantics=("parallel", "parallel")),
        cost_estimate=cost,
    )(ids, emb_table, pe)

    return out[:, :S, :]


if __name__ == "__main__":
    # Small deterministic problem: vocab=100, d_model=128 (lane-dense), batch=2, seq=8.
    vocab_size, d_model, batch, seq = 100, 128, 2, 8
    key = jax.random.PRNGKey(0)
    k_ids, k_emb = jax.random.split(key)

    ids = jax.random.randint(k_ids, (batch, seq), 0, vocab_size, dtype=jnp.int32)
    # PyTorch nn.Embedding default init: N(0, 1).
    emb_table = jax.random.normal(k_emb, (vocab_size, d_model), dtype=jnp.float32)
    pe = sinusoidal_positional_encoding(seq, d_model)

    out = transformer_embedding(ids, emb_table, pe, block_s=128)
    out = jax.block_until_ready(out)

    # Cross-check against plain-JAX reference (eval-mode dropout = identity).
    ref = emb_table[ids] * math.sqrt(d_model) + pe[None, :, :]
    assert out.shape == (batch, seq, d_model)
    assert jnp.allclose(out, ref, atol=1e-5, rtol=1e-5), "mismatch vs reference"

    print("KERNEL_OK")
</pallas_src>

<mosaic_0001>
module attributes {stable_mosaic.version = 11 : i64} {
  func.func @kernel(%arg0: i32, %arg1: i32, %arg2: memref<2x8xi32, #tpu.memory_space<smem>>, %arg3: memref<100x128xf32, #tpu.memory_space<any>>, %arg4: memref<8x128xf32, #tpu.memory_space<vmem>>, %arg5: memref<1x8x128xf32, #tpu.memory_space<vmem>>, %arg6: memref<8x128xf32, #tpu.memory_space<vmem>>, %arg7: memref<!tpu.dma_semaphore, #tpu.memory_space<semaphore_mem>>) attributes {dimension_semantics = [#tpu.dimension_semantics<parallel>, #tpu.dimension_semantics<parallel>], iteration_bounds = array<i64: 2, 1>, scalar_prefetch = 1 : i64, scratch_operands = 2 : i64, tpu.core_type = #tpu.core_type<tc>, window_params = [{}, {transform_indices = @transform_1, window_bounds = array<i64: 8, 128>}, {transform_indices = @transform_2, window_bounds = array<i64: 1, 8, 128>}]} {
    %c8_i32 = arith.constant 8 : i32
    %0 = arith.muli %arg1, %c8_i32 : i32
    %c0_i32 = arith.constant 0 : i32
    %1 = arith.addi %0, %c0_i32 : i32
    %2 = arith.index_cast %arg0 : i32 to index
    %3 = arith.index_cast %1 : i32 to index
    %4 = memref.load %arg2[%2, %3] : memref<2x8xi32, #tpu.memory_space<smem>>
    %c0_i32_0 = arith.constant 0 : i32
    %5 = tpu.memref_slice %arg3[%4, %c0_i32_0] : memref<100x128xf32, #tpu.memory_space<any>> -> memref<1x128xf32, #tpu.memory_space<any>>
    %c0_i32_1 = arith.constant 0 : i32
    %c0_i32_2 = arith.constant 0 : i32
    %6 = tpu.memref_slice %arg6[%c0_i32_1, %c0_i32_2] : memref<8x128xf32, #tpu.memory_space<vmem>> -> memref<1x128xf32, #tpu.memory_space<vmem>>
    tpu.enqueue_dma source(%5 : memref<1x128xf32, #tpu.memory_space<any>>) target(%6 : memref<1x128xf32, #tpu.memory_space<vmem>>) target_semaphore(%arg7 : memref<!tpu.dma_semaphore, #tpu.memory_space<semaphore_mem>>)
    %c1_i32 = arith.constant 1 : i32
    %7 = arith.addi %0, %c1_i32 : i32
    %8 = arith.index_cast %arg0 : i32 to index
    %9 = arith.index_cast %7 : i32 to index
    %10 = memref.load %arg2[%8, %9] : memref<2x8xi32, #tpu.memory_space<smem>>
    %c0_i32_3 = arith.constant 0 : i32
    %11 = tpu.memref_slice %arg3[%10, %c0_i32_3] : memref<100x128xf32, #tpu.memory_space<any>> -> memref<1x128xf32, #tpu.memory_space<any>>
    %c1_i32_4 = arith.constant 1 : i32
    %c0_i32_5 = arith.constant 0 : i32
    %12 = tpu.memref_slice %arg6[%c1_i32_4, %c0_i32_5] : memref<8x128xf32, #tpu.memory_space<vmem>> -> memref<1x128xf32, #tpu.memory_space<vmem>>
    tpu.enqueue_dma source(%11 : memref<1x128xf32, #tpu.memory_space<any>>) target(%12 : memref<1x128xf32, #tpu.memory_space<vmem>>) target_semaphore(%arg7 : memref<!tpu.dma_semaphore, #tpu.memory_space<semaphore_mem>>)
    %c2_i32 = arith.constant 2 : i32
    %13 = arith.addi %0, %c2_i32 : i32
    %14 = arith.index_cast %arg0 : i32 to index
    %15 = arith.index_cast %13 : i32 to index
    %16 = memref.load %arg2[%14, %15] : memref<2x8xi32, #tpu.memory_space<smem>>
    %c0_i32_6 = arith.constant 0 : i32
    %17 = tpu.memref_slice %arg3[%16, %c0_i32_6] : memref<100x128xf32, #tpu.memory_space<any>> -> memref<1x128xf32, #tpu.memory_space<any>>
    %c2_i32_7 = arith.constant 2 : i32
    %c0_i32_8 = arith.constant 0 : i32
    %18 = tpu.memref_slice %arg6[%c2_i32_7, %c0_i32_8] : memref<8x128xf32, #tpu.memory_space<vmem>> -> memref<1x128xf32, #tpu.memory_space<vmem>>
    tpu.enqueue_dma source(%17 : memref<1x128xf32, #tpu.memory_space<any>>) target(%18 : memref<1x128xf32, #tpu.memory_space<vmem>>) target_semaphore(%arg7 : memref<!tpu.dma_semaphore, #tpu.memory_space<semaphore_mem>>)
    %c3_i32 = arith.constant 3 : i32
    %19 = arith.addi %0, %c3_i32 : i32
    %20 = arith.index_cast %arg0 : i32 to index
    %21 = arith.index_cast %19 : i32 to index
    %22 = memref.load %arg2[%20, %21] : memref<2x8xi32, #tpu.memory_space<smem>>
    %c0_i32_9 = arith.constant 0 : i32
    %23 = tpu.memref_slice %arg3[%22, %c0_i32_9] : memref<100x128xf32, #tpu.memory_space<any>> -> memref<1x128xf32, #tpu.memory_space<any>>
    %c3_i32_10 = arith.constant 3 : i32
    %c0_i32_11 = arith.constant 0 : i32
    %24 = tpu.memref_slice %arg6[%c3_i32_10, %c0_i32_11] : memref<8x128xf32, #tpu.memory_space<vmem>> -> memref<1x128xf32, #tpu.memory_space<vmem>>
    tpu.enqueue_dma source(%23 : memref<1x128xf32, #tpu.memory_space<any>>) target(%24 : memref<1x128xf32, #tpu.memory_space<vmem>>) target_semaphore(%arg7 : memref<!tpu.dma_semaphore, #tpu.memory_space<semaphore_mem>>)
    %c4_i32 = arith.constant 4 : i32
    %25 = arith.addi %0, %c4_i32 : i32
    %26 = arith.index_cast %arg0 : i32 to index
    %27 = arith.index_cast %25 : i32 to index
    %28 = memref.load %arg2[%26, %27] : memref<2x8xi32, #tpu.memory_space<smem>>
    %c0_i32_12 = arith.constant 0 : i32
    %29 = tpu.memref_slice %arg3[%28, %c0_i32_12] : memref<100x128xf32, #tpu.memory_space<any>> -> memref<1x128xf32, #tpu.memory_space<any>>
    %c4_i32_13 = arith.constant 4 : i32
    %c0_i32_14 = arith.constant 0 : i32
    %30 = tpu.memref_slice %arg6[%c4_i32_13, %c0_i32_14] : memref<8x128xf32, #tpu.memory_space<vmem>> -> memref<1x128xf32, #tpu.memory_space<vmem>>
    tpu.enqueue_dma source(%29 : memref<1x128xf32, #tpu.memory_space<any>>) target(%30 : memref<1x128xf32, #tpu.memory_space<vmem>>) target_semaphore(%arg7 : memref<!tpu.dma_semaphore, #tpu.memory_space<semaphore_mem>>)
    %c5_i32 = arith.constant 5 : i32
    %31 = arith.addi %0, %c5_i32 : i32
    %32 = arith.index_cast %arg0 : i32 to index
    %33 = arith.index_cast %31 : i32 to index
    %34 = memref.load %arg2[%32, %33] : memref<2x8xi32, #tpu.memory_space<smem>>
    %c0_i32_15 = arith.constant 0 : i32
    %35 = tpu.memref_slice %arg3[%34, %c0_i32_15] : memref<100x128xf32, #tpu.memory_space<any>> -> memref<1x128xf32, #tpu.memory_space<any>>
    %c5_i32_16 = arith.constant 5 : i32
    %c0_i32_17 = arith.constant 0 : i32
    %36 = tpu.memref_slice %arg6[%c5_i32_16, %c0_i32_17] : memref<8x128xf32, #tpu.memory_space<vmem>> -> memref<1x128xf32, #tpu.memory_space<vmem>>
    tpu.enqueue_dma source(%35 : memref<1x128xf32, #tpu.memory_space<any>>) target(%36 : memref<1x128xf32, #tpu.memory_space<vmem>>) target_semaphore(%arg7 : memref<!tpu.dma_semaphore, #tpu.memory_space<semaphore_mem>>)
    %c6_i32 = arith.constant 6 : i32
    %37 = arith.addi %0, %c6_i32 : i32
    %38 = arith.index_cast %arg0 : i32 to index
    %39 = arith.index_cast %37 : i32 to index
    %40 = memref.load %arg2[%38, %39] : memref<2x8xi32, #tpu.memory_space<smem>>
    %c0_i32_18 = arith.constant 0 : i32
    %41 = tpu.memref_slice %arg3[%40, %c0_i32_18] : memref<100x128xf32, #tpu.memory_space<any>> -> memref<1x128xf32, #tpu.memory_space<any>>
    %c6_i32_19 = arith.constant 6 : i32
    %c0_i32_20 = arith.constant 0 : i32
    %42 = tpu.memref_slice %arg6[%c6_i32_19, %c0_i32_20] : memref<8x128xf32, #tpu.memory_space<vmem>> -> memref<1x128xf32, #tpu.memory_space<vmem>>
    tpu.enqueue_dma source(%41 : memref<1x128xf32, #tpu.memory_space<any>>) target(%42 : memref<1x128xf32, #tpu.memory_space<vmem>>) target_semaphore(%arg7 : memref<!tpu.dma_semaphore, #tpu.memory_space<semaphore_mem>>)
    %c7_i32 = arith.constant 7 : i32
    %43 = arith.addi %0, %c7_i32 : i32
    %44 = arith.index_cast %arg0 : i32 to index
    %45 = arith.index_cast %43 : i32 to index
    %46 = memref.load %arg2[%44, %45] : memref<2x8xi32, #tpu.memory_space<smem>>
    %c0_i32_21 = arith.constant 0 : i32
    %47 = tpu.memref_slice %arg3[%46, %c0_i32_21] : memref<100x128xf32, #tpu.memory_space<any>> -> memref<1x128xf32, #tpu.memory_space<any>>
    %c7_i32_22 = arith.constant 7 : i32
    %c0_i32_23 = arith.constant 0 : i32
    %48 = tpu.memref_slice %arg6[%c7_i32_22, %c0_i32_23] : memref<8x128xf32, #tpu.memory_space<vmem>> -> memref<1x128xf32, #tpu.memory_space<vmem>>
    tpu.enqueue_dma source(%47 : memref<1x128xf32, #tpu.memory_space<any>>) target(%48 : memref<1x128xf32, #tpu.memory_space<vmem>>) target_semaphore(%arg7 : memref<!tpu.dma_semaphore, #tpu.memory_space<semaphore_mem>>)
    %c0_i32_24 = arith.constant 0 : i32
    %c0_i32_25 = arith.constant 0 : i32
    %49 = tpu.memref_slice %arg3[%c0_i32_24, %c0_i32_25] : memref<100x128xf32, #tpu.memory_space<any>> -> memref<1x128xf32, #tpu.memory_space<any>>
    %c0_i32_26 = arith.constant 0 : i32
    %c0_i32_27 = arith.constant 0 : i32
    %50 = tpu.memref_slice %arg6[%c0_i32_26, %c0_i32_27] : memref<8x128xf32, #tpu.memory_space<vmem>> -> memref<1x128xf32, #tpu.memory_space<vmem>>
    tpu.wait_dma2 semaphore(%arg7 : memref<!tpu.dma_semaphore, #tpu.memory_space<semaphore_mem>>) src(%49 : memref<1x128xf32, #tpu.memory_space<any>>) dst(%50 : memref<1x128xf32, #tpu.memory_space<vmem>>)
    %c0_i32_28 = arith.constant 0 : i32
    %c0_i32_29 = arith.constant 0 : i32
    %51 = tpu.memref_slice %arg3[%c0_i32_28, %c0_i32_29] : memref<100x128xf32, #tpu.memory_space<any>> -> memref<1x128xf32, #tpu.memory_space<any>>
    %c1_i32_30 = arith.constant 1 : i32
    %c0_i32_31 = arith.constant 0 : i32
    %52 = tpu.memref_slice %arg6[%c1_i32_30, %c0_i32_31] : memref<8x128xf32, #tpu.memory_space<vmem>> -> memref<1x128xf32, #tpu.memory_space<vmem>>
    tpu.wait_dma2 semaphore(%arg7 : memref<!tpu.dma_semaphore, #tpu.memory_space<semaphore_mem>>) src(%51 : memref<1x128xf32, #tpu.memory_space<any>>) dst(%52 : memref<1x128xf32, #tpu.memory_space<vmem>>)
    %c0_i32_32 = arith.constant 0 : i32
    %c0_i32_33 = arith.constant 0 : i32
    %53 = tpu.memref_slice %arg3[%c0_i32_32, %c0_i32_33] : memref<100x128xf32, #tpu.memory_space<any>> -> memref<1x128xf32, #tpu.memory_space<any>>
    %c2_i32_34 = arith.constant 2 : i32
    %c0_i32_35 = arith.constant 0 : i32
    %54 = tpu.memref_slice %arg6[%c2_i32_34, %c0_i32_35] : memref<8x128xf32, #tpu.memory_space<vmem>> -> memref<1x128xf32, #tpu.memory_space<vmem>>
    tpu.wait_dma2 semaphore(%arg7 : memref<!tpu.dma_semaphore, #tpu.memory_space<semaphore_mem>>) src(%53 : memref<1x128xf32, #tpu.memory_space<any>>) dst(%54 : memref<1x128xf32, #tpu.memory_space<vmem>>)
    %c0_i32_36 = arith.constant 0 : i32
    %c0_i32_37 = arith.constant 0 : i32
    %55 = tpu.memref_slice %arg3[%c0_i32_36, %c0_i32_37] : memref<100x128xf32, #tpu.memory_space<any>> -> memref<1x128xf32, #tpu.memory_space<any>>
    %c3_i32_38 = arith.constant 3 : i32
    %c0_i32_39 = arith.constant 0 : i32
    %56 = tpu.memref_slice %arg6[%c3_i32_38, %c0_i32_39] : memref<8x128xf32, #tpu.memory_space<vmem>> -> memref<1x128xf32, #tpu.memory_space<vmem>>
    tpu.wait_dma2 semaphore(%arg7 : memref<!tpu.dma_semaphore, #tpu.memory_space<semaphore_mem>>) src(%55 : memref<1x128xf32, #tpu.memory_space<any>>) dst(%56 : memref<1x128xf32, #tpu.memory_space<vmem>>)
    %c0_i32_40 = arith.constant 0 : i32
    %c0_i32_41 = arith.constant 0 : i32
    %57 = tpu.memref_slice %arg3[%c0_i32_40, %c0_i32_41] : memref<100x128xf32, #tpu.memory_space<any>> -> memref<1x128xf32, #tpu.memory_space<any>>
    %c4_i32_42 = arith.constant 4 : i32
    %c0_i32_43 = arith.constant 0 : i32
    %58 = tpu.memref_slice %arg6[%c4_i32_42, %c0_i32_43] : memref<8x128xf32, #tpu.memory_space<vmem>> -> memref<1x128xf32, #tpu.memory_space<vmem>>
    tpu.wait_dma2 semaphore(%arg7 : memref<!tpu.dma_semaphore, #tpu.memory_space<semaphore_mem>>) src(%57 : memref<1x128xf32, #tpu.memory_space<any>>) dst(%58 : memref<1x128xf32, #tpu.memory_space<vmem>>)
    %c0_i32_44 = arith.constant 0 : i32
    %c0_i32_45 = arith.constant 0 : i32
    %59 = tpu.memref_slice %arg3[%c0_i32_44, %c0_i32_45] : memref<100x128xf32, #tpu.memory_space<any>> -> memref<1x128xf32, #tpu.memory_space<any>>
    %c5_i32_46 = arith.constant 5 : i32
    %c0_i32_47 = arith.constant 0 : i32
    %60 = tpu.memref_slice %arg6[%c5_i32_46, %c0_i32_47] : memref<8x128xf32, #tpu.memory_space<vmem>> -> memref<1x128xf32, #tpu.memory_space<vmem>>
    tpu.wait_dma2 semaphore(%arg7 : memref<!tpu.dma_semaphore, #tpu.memory_space<semaphore_mem>>) src(%59 : memref<1x128xf32, #tpu.memory_space<any>>) dst(%60 : memref<1x128xf32, #tpu.memory_space<vmem>>)
    %c0_i32_48 = arith.constant 0 : i32
    %c0_i32_49 = arith.constant 0 : i32
    %61 = tpu.memref_slice %arg3[%c0_i32_48, %c0_i32_49] : memref<100x128xf32, #tpu.memory_space<any>> -> memref<1x128xf32, #tpu.memory_space<any>>
    %c6_i32_50 = arith.constant 6 : i32
    %c0_i32_51 = arith.constant 0 : i32
    %62 = tpu.memref_slice %arg6[%c6_i32_50, %c0_i32_51] : memref<8x128xf32, #tpu.memory_space<vmem>> -> memref<1x128xf32, #tpu.memory_space<vmem>>
    tpu.wait_dma2 semaphore(%arg7 : memref<!tpu.dma_semaphore, #tpu.memory_space<semaphore_mem>>) src(%61 : memref<1x128xf32, #tpu.memory_space<any>>) dst(%62 : memref<1x128xf32, #tpu.memory_space<vmem>>)
    %c0_i32_52 = arith.constant 0 : i32
    %c0_i32_53 = arith.constant 0 : i32
    %63 = tpu.memref_slice %arg3[%c0_i32_52, %c0_i32_53] : memref<100x128xf32, #tpu.memory_space<any>> -> memref<1x128xf32, #tpu.memory_space<any>>
    %c7_i32_54 = arith.constant 7 : i32
    %c0_i32_55 = arith.constant 0 : i32
    %64 = tpu.memref_slice %arg6[%c7_i32_54, %c0_i32_55] : memref<8x128xf32, #tpu.memory_space<vmem>> -> memref<1x128xf32, #tpu.memory_space<vmem>>
    tpu.wait_dma2 semaphore(%arg7 : memref<!tpu.dma_semaphore, #tpu.memory_space<semaphore_mem>>) src(%63 : memref<1x128xf32, #tpu.memory_space<any>>) dst(%64 : memref<1x128xf32, #tpu.memory_space<vmem>>)
    %c0 = arith.constant 0 : index
    %c0_56 = arith.constant 0 : index
    %65 = vector.load %arg6[%c0, %c0_56] : memref<8x128xf32, #tpu.memory_space<vmem>>, vector<8x128xf32>
    %cst = arith.constant 11.3137083 : f32
    %66 = vector.broadcast %cst : f32 to vector<8x128xf32>
    %67 = arith.mulf %65, %66 : vector<8x128xf32>
    %c0_57 = arith.constant 0 : index
    %c0_58 = arith.constant 0 : index
    %68 = vector.load %arg4[%c0_57, %c0_58] : memref<8x128xf32, #tpu.memory_space<vmem>>, vector<8x128xf32>
    %69 = arith.addf %67, %68 : vector<8x128xf32>
    %70 = vector.shape_cast %69 : vector<8x128xf32> to vector<1x8x128xf32>
    %c0_59 = arith.constant 0 : index
    %c0_60 = arith.constant 0 : index
    %c0_61 = arith.constant 0 : index
    %71 = vector.load %arg5[%c0_59, %c0_60, %c0_61] : memref<1x8x128xf32, #tpu.memory_space<vmem>>, vector<1x8x128xf32>
    tpu.vector_store %arg5[%c0_59, %c0_60, %c0_61], %70 {strides = array<i32>} : memref<1x8x128xf32, #tpu.memory_space<vmem>>, vector<1x8x128xf32>,
    return
  }
  func.func @transform_1(%arg0: i32, %arg1: i32, %arg2: memref<2x8xi32, #tpu.memory_space<smem>>) -> (i32, i32) {
    %c0_i32 = arith.constant 0 : i32
    %c0_i32_0 = arith.constant 0 : i32
    return %arg1, %c0_i32 : i32, i32
  }
  func.func @transform_2(%arg0: i32, %arg1: i32, %arg2: memref<2x8xi32, #tpu.memory_space<smem>>) -> (i32, i32, i32) {
    %c0_i32 = arith.constant 0 : i32
    %c0_i32_0 = arith.constant 0 : i32
    return %arg0, %arg1, %c0_i32 : i32, i32, i32
  }
}

</mosaic_0001>

<llo_original>
// kernel: tpu_custom_call.1
$region0: #{tpu_custom_call.1}
  #allocation0 [shape = 'u32[]', space=smem, size = 0x4, offset = 0x4, fixed_abs, tag = 'smem constant byte address 0x4 - core index']
  #allocation1 [shape = 'u32[144,128]{1,0:T(1,128)}', space=vmem, size = 0x12000, scoped, tag = 'internal scratch']
  #allocation2 [shape = 'f32[8,128]{1,0:T(8,128)}', space=vmem, size = 0x1000, scoped, tag = 'scratch operand']
  #allocation3 [shape = 's32[1]{0}', space=sflag, size = 0x4, scoped, tag = 'scratch operand']
  #allocation4 [shape = 's32[1]{0}', space=sflag, size = 0x4, scoped, tag = 'scoped memory for tpu_custom_call.1']
  #allocation5 [shape = 'u8[1024]{0}', space=smem, size = 0x400, scoped, tag = 'prefetched SMEM operand 0']
  #allocation10 [shape = 's32[]', space=sflag, size = 0x4, offset = 0, fixed_abs, tag = 'sflag constant byte address 0x0 - dummy sync flag']
  #allocation11 [shape = 's32[]', space=sflag, size = 0x4, offset = 0, fixed_abs, tag = 'sflag constant byte address 0x0 - dummy sync flag']
  #allocation12 [shape = 'u32[]', space=smem, size = 0x4, offset = 0x44, fixed_abs, tag = 'smem constant byte address 0x44 - assertion arg 0']
  #allocation13 [shape = 'u32[]', space=smem, size = 0x4, offset = 0x48, fixed_abs, tag = 'smem constant byte address 0x48 - assertion arg 1']
  #allocation14 [shape = 's32[]', space=sflag, size = 0x4, offset = 0, fixed_abs, tag = 'sflag constant byte address 0x0 - dummy sync flag']
  #allocation15 [shape = 's32[]', space=sflag, size = 0x4, offset = 0, fixed_abs, tag = 'sflag constant byte address 0x0 - dummy sync flag']
  #allocation16 [shape = 's32[]', space=sflag, size = 0x4, offset = 0, fixed_abs, tag = 'sflag constant byte address 0x0 - dummy sync flag']
  #allocation17 [shape = 's32[]', space=sflag, size = 0x4, offset = 0, fixed_abs, tag = 'sflag constant byte address 0x0 - dummy sync flag']
  #allocation18 [shape = 's32[]', space=sflag, size = 0x4, offset = 0, fixed_abs, tag = 'sflag constant byte address 0x0 - dummy sync flag']
  #allocation19 [shape = 's32[]', space=sflag, size = 0x4, offset = 0, fixed_abs, tag = 'sflag constant byte address 0x0 - dummy sync flag']
  #allocation20 [shape = 's32[]', space=sflag, size = 0x4, offset = 0, fixed_abs, tag = 'sflag constant byte address 0x0 - dummy sync flag']
  #allocation21 [shape = 's32[]', space=sflag, size = 0x4, offset = 0, fixed_abs, tag = 'sflag constant byte address 0x0 - dummy sync flag']
  #allocation22 [shape = 's32[]', space=sflag, size = 0x4, offset = 0, fixed_abs, tag = 'sflag constant byte address 0x0 - dummy sync flag']
  #allocation23 [shape = 's32[]', space=sflag, size = 0x4, offset = 0, fixed_abs, tag = 'sflag constant byte address 0x0 - dummy sync flag']
  #allocation24 [shape = 's32[]', space=sflag, size = 0x4, offset = 0, fixed_abs, tag = 'sflag constant byte address 0x0 - dummy sync flag']
  #allocation25 [shape = 's32[]', space=sflag, size = 0x4, offset = 0, fixed_abs, tag = 'sflag constant byte address 0x0 - dummy sync flag']
  #allocation26 [shape = 's32[]', space=sflag, size = 0x4, offset = 0, fixed_abs, tag = 'sflag constant byte address 0x0 - dummy sync flag']
  #allocation27 [shape = 's32[]', space=sflag, size = 0x4, offset = 0, fixed_abs, tag = 'sflag constant byte address 0x0 - dummy sync flag']
  %s0 = inlined_call_operand.hbm [shape: s32[2,8], index: 0, kind: input, shape index: {}]
  %s1 = inlined_call_operand.hbm [shape: f32[100,128], index: 1, kind: input, shape index: {}]
  %s2 = inlined_call_operand.hbm [shape: f32[8,128], index: 2, kind: input, shape index: {}]
  %s3 = inlined_call_operand.hbm [shape: f32[2,8,128], index: 3, kind: output, shape index: {}]
  %s4 = sld [smem:[#allocation0]]
  $region73: #{tpu_custom_call.1} parent=0
    _
  %s6 = ssub.s32 1, %s4
  %s7 = scalar_select 0, %s6, %s4
  %9 = dma.hbm_to_smem %s0, 32, [#allocation5], [#allocation4]
  %10 = dma.done [#allocation4], 32
  %11 = sfence
  $region1: #{tpu_custom_call.1} parent=0
    #allocation6 [shape = 'u8[4096]{0}', space=vmem, size = 0x1000, scoped, tag = 'input window, operand 2, single buffered']
    #allocation7 [shape = 's32[2]{0}', space=sflag, size = 0x8, scoped, tag = 'scoped memory for tpu_custom_call.1']
    #allocation8 [shape = 's32[2]{0}', space=sflag, size = 0x8, scoped, tag = 'scoped memory for tpu_custom_call.1']
    #allocation9 [shape = 'u8[8192]{0}', space=vmem, size = 0x2000, scoped, tag = 'output window, operand 0']
    %12 = vsyncpa [#allocation7], 0
    %13 = vsyncpa [#allocation8], 0
    %s14 = scalar_lea.sflag [#allocation8], 1
    %15 = vsyncpa %s14, 0
    loop: start=0, step=1, limit=4
    $region2: #{tpu_custom_call.1} parent=1 // loop_pre_header
      _
    $region3: #{tpu_custom_call.1} parent=1 // loop_header
      %s17 = sphi 0, %s21
      %p18 = scmp.ge.s32.totalorder %s17, 4
      %s24 = sphi 0, %s36
      %s25 = sphi 0, %s32
      %s26 = sphi 0, %s24
      %s27 = sphi 0, %s25
      %s28 = sphi 0, %s26
      %s29 = sphi 0, %s27
      %s39 = sphi 0, %s41
      %s42 = sphi 0, %s39
      %s43 = sphi 0, %s42
      %s59 = sphi 0, %s43
      %s67 = sphi 0, %s69
      %s70 = sphi 0, %s67
      %s71 = sphi 0, %s70
      %s87 = sphi 0, %s71
    $region4: #{tpu_custom_call.1} parent=1 // loop_header_branch
      %20 = sbr.rel (%p18) target = $region8
    $region5: #{tpu_custom_call.1} parent=1 // loop_body
      %s22 = ssub.s32 %s17, 1
      %s23 = ssub.s32 %s17, 2
      %s30 = sadd.s32 1, %s25
      %p31 = scmp.ge.s32.totalorder %s30, 1
      %s32 = scalar_select %p31, 0, %s30
      %s33 = sadd.s32 1, %s24
      %s34 = scalar_select %p31, %s33, %s24
      %p35 = scmp.ge.s32.totalorder %s34, 2
      %s36 = scalar_select %p35, 0, %s34
      %s37 = ssub.s32 %s25, %s32
      %p38 = scmp.eq.s32.totalorder %s37, 0
      %s40 = sadd.s32 %s39, 1
      %s41 = scalar_select %p38, %s39, %s40
      %p44 = pneg %p38
      %p45 = scmp.eq.s32.totalorder %s17, 1
      %p46 = por %p44, %p45
      %p47 = scmp.ne.s32.totalorder %s39, %s42
      %p48 = scmp.eq.s32.totalorder %s17, 0
      %p49 = por %p47, %p48
      %p50 = scmp.ne.s32.totalorder %s39, %s42
      %p51 = scmp.eq.s32.totalorder %s22, 1
      %p52 = por %p50, %p51
      %p53 = scmp.ne.s32.totalorder %s42, %s43
      %p54 = scmp.eq.s32.totalorder %s22, 0
      %p55 = por %p53, %p54
      %p56 = scmp.ne.s32.totalorder %s42, %s43
      %p57 = scmp.eq.s32.totalorder %s23, 1
      %p58 = por %p56, %p57
      %p60 = scmp.ne.s32.totalorder %s43, %s59
      %p61 = scmp.eq.s32.totalorder %s23, 0
      %p62 = por %p60, %p61
      %s63 = ssub.s32 %s24, %s36
      %s64 = ssub.s32 %s25, %s32
      %s65 = sor.u32 %s63, %s64
      %p66 = scmp.eq.s32.totalorder %s65, 0
      %s68 = sadd.s32 %s67, 1
      %s69 = scalar_select %p66, %s67, %s68
      %p72 = pneg %p66
      %p73 = scmp.eq.s32.totalorder %s17, 1
      %p74 = por %p72, %p73
      %p75 = scmp.ne.s32.totalorder %s67, %s70
      %p76 = scmp.eq.s32.totalorder %s17, 0
      %p77 = por %p75, %p76
      %p78 = scmp.ne.s32.totalorder %s67, %s70
      %p79 = scmp.eq.s32.totalorder %s22, 1
      %p80 = por %p78, %p79
      %p81 = scmp.ne.s32.totalorder %s70, %s71
      %p82 = scmp.eq.s32.totalorder %s22, 0
      %p83 = por %p81, %p82
      %p84 = scmp.ne.s32.totalorder %s70, %s71
      %p85 = scmp.eq.s32.totalorder %s23, 1
      %p86 = por %p84, %p85
      %p88 = scmp.ne.s32.totalorder %s71, %s87
      %p89 = scmp.eq.s32.totalorder %s23, 0
      %p90 = por %p88, %p89
      %p91 = scmp.le.s32.totalorder 1, %s17
      %p92 = scmp.lt.s32.totalorder %s17, 3
      %p93 = pnand %p91, %p92
      %p94 = pneg %p93
      // Predicated region
      $region9: #{tpu_custom_call.1} parent=5 // pred_check
        _
      $region10: #{tpu_custom_call.1} parent=5 // pred_check_branch
        %96 = sbr.rel (%p93) target = $region12
      $region11: #{tpu_custom_call.1} parent=5 // pred_region
        %s97 = ssub.s32 %s17, 1
        // Predicated region
        $region13: #{tpu_custom_call.1} parent=11 // pred_check
          %p98 = pneg %p55
        $region14: #{tpu_custom_call.1} parent=11 // pred_check_branch
          %100 = sbr.rel (%p98) target = $region16
        $region15: #{tpu_custom_call.1} parent=11 // pred_region
          %s102 = ssub.s32 128, 128
          %103 = vsyncadd [#allocation7], %s102
          %s104 = smul.addr %s27, 128
          %s105 = scalar_lea.hbm %s2, %s104
          %s107 = sshll.u32 [#allocation6], 4
          %s108 = int_to_ptr.vmem [resolvable:$true] %s107
          %110 = dma.hbm_to_vmem [thread:$0]  %s105, 128, %s108, [#allocation7]
        $region16: #{tpu_custom_call.1} parent=11 // pred_fallthru
          _
      $region12: #{tpu_custom_call.1} parent=5 // pred_fallthru
        _
      %p111 = scmp.lt.s32.totalorder %s17, 2
      // Predicated region
      $region17: #{tpu_custom_call.1} parent=5 // pred_check
        %p112 = pneg %p111
      $region18: #{tpu_custom_call.1} parent=5 // pred_check_branch
        %114 = sbr.rel (%p112) target = $region20
      $region19: #{tpu_custom_call.1} parent=5 // pred_region
        _
      $region20: #{tpu_custom_call.1} parent=5 // pred_fallthru
        _
      %p115 = scmp.le.s32.totalorder 1, %s17
      %p116 = scmp.lt.s32.totalorder %s17, 3
      %p117 = pnand %p115, %p116
      %p118 = pneg %p117
      // Predicated region
      $region21: #{tpu_custom_call.1} parent=5 // pred_check
        _
      $region22: #{tpu_custom_call.1} parent=5 // pred_check_branch
        %120 = sbr.rel (%p117) target = $region24
      $region23: #{tpu_custom_call.1} parent=5 // pred_region
        %s121 = ssub.s32 %s17, 1
        // Predicated region
        $region25: #{tpu_custom_call.1} parent=23 // pred_check
          %p122 = pneg %p55
        $region26: #{tpu_custom_call.1} parent=23 // pred_check_branch
          %124 = sbr.rel (%p122) target = $region28
        $region27: #{tpu_custom_call.1} parent=23 // pred_region
          %125 = dma.done [#allocation7], 128
        $region28: #{tpu_custom_call.1} parent=23 // pred_fallthru
          _
        %p126 = pneg %p55
        %p127 = pneg %p52
        %p128 = pneg %p83
        %p129 = pneg %p80
        %s130 = sand.u32 %s70, 1
        %s131 = scalar_lea.sflag [#allocation8], %s130
        %s132 = sand.u32 %s70, 1
        %s133 = smul.addr %s132, 8
        %s134 = scalar_lea.vmem [#allocation9], %s133
        %s135 = smul.u32 %s27, 8
        %s136 = sshra.s32 %s135, 7
        %s137 = sand.u32 %s135, 127
        %s138 = sadd.s32 %s136, %s26
        %s139 = smul.u32 %s138, 128
        %s140 = sshra.s32 %s135, 7
        %s141 = sand.u32 %s135, 127
        %s142 = sadd.s32 %s139, %s141
        %s143 = sld [smem:[#allocation5 + %s142]]
        %s144 = smul.addr %s143, 16
        %s145 = scalar_lea.hbm %s1, %s144
        // Predicated region
        $region29: #{tpu_custom_call.1} parent=23 // pred_check
          _
        $region30: #{tpu_custom_call.1} parent=23 // pred_check_branch
          %147 = sbr.rel target = $region32
        $region31: #{tpu_custom_call.1} parent=23 // pred_region
          %148 = sst [smem:[#allocation12]] [#allocation11]
          %149 = sst [smem:[#allocation13]] [#allocation10]
        $region32: #{tpu_custom_call.1} parent=23 // pred_fallthru
          _
        %151 = shalt.err (0)
        %s153 = sshll.u32 [#allocation2], 4
        %s154 = int_to_ptr.vmem [resolvable:$true] %s153
        %156 = dma.hbm_to_vmem [thread:$0]  %s145, 16, %s154, [#allocation3]
        %s157 = sadd.s32 %s135, 1
        %s158 = sshra.s32 %s157, 7
        %s159 = sand.u32 %s157, 127
        %s160 = sadd.s32 %s158, %s26
        %s161 = smul.u32 %s160, 128
        %s162 = sshra.s32 %s157, 7
        %s163 = sand.u32 %s157, 127
        %s164 = sadd.s32 %s161, %s163
        %s165 = sld [smem:[#allocation5 + %s164]]
        %s166 = smul.addr %s165, 16
        %s167 = scalar_lea.hbm %s1, %s166
        %s168 = scalar_lea.vmem [#allocation2], 1
        // Predicated region
        $region33: #{tpu_custom_call.1} parent=23 // pred_check
          _
        $region34: #{tpu_custom_call.1} parent=23 // pred_check_branch
          %170 = sbr.rel target = $region36
        $region35: #{tpu_custom_call.1} parent=23 // pred_region
          %171 = sst [smem:[#allocation12]] [#allocation15]
          %172 = sst [smem:[#allocation13]] [#allocation14]
        $region36: #{tpu_custom_call.1} parent=23 // pred_fallthru
          _
        %174 = shalt.err (0)
        %s176 = sshll.u32 %s168, 4
        %s177 = int_to_ptr.vmem [resolvable:$true] %s176
        %179 = dma.hbm_to_vmem [thread:$0]  %s167, 16, %s177, [#allocation3]
        %s180 = sadd.s32 %s135, 2
        %s181 = sshra.s32 %s180, 7
        %s182 = sand.u32 %s180, 127
        %s183 = sadd.s32 %s181, %s26
        %s184 = smul.u32 %s183, 128
        %s185 = sshra.s32 %s180, 7
        %s186 = sand.u32 %s180, 127
        %s187 = sadd.s32 %s184, %s186
        %s188 = sld [smem:[#allocation5 + %s187]]
        %s189 = smul.addr %s188, 16
        %s190 = scalar_lea.hbm %s1, %s189
        %s191 = scalar_lea.vmem [#allocation2], 2
        // Predicated region
        $region37: #{tpu_custom_call.1} parent=23 // pred_check
          _
        $region38: #{tpu_custom_call.1} parent=23 // pred_check_branch
          %193 = sbr.rel target = $region40
        $region39: #{tpu_custom_call.1} parent=23 // pred_region
          %194 = sst [smem:[#allocation12]] [#allocation17]
          %195 = sst [smem:[#allocation13]] [#allocation16]
        $region40: #{tpu_custom_call.1} parent=23 // pred_fallthru
          _
        %197 = shalt.err (0)
        %s199 = sshll.u32 %s191, 4
        %s200 = int_to_ptr.vmem [resolvable:$true] %s199
        %202 = dma.hbm_to_vmem [thread:$0]  %s190, 16, %s200, [#allocation3]
        %s203 = sadd.s32 %s135, 3
        %s204 = sshra.s32 %s203, 7
        %s205 = sand.u32 %s203, 127
        %s206 = sadd.s32 %s204, %s26
        %s207 = smul.u32 %s206, 128
        %s208 = sshra.s32 %s203, 7
        %s209 = sand.u32 %s203, 127
        %s210 = sadd.s32 %s207, %s209
        %s211 = sld [smem:[#allocation5 + %s210]]
        %s212 = smul.addr %s211, 16
        %s213 = scalar_lea.hbm %s1, %s212
        %s214 = scalar_lea.vmem [#allocation2], 3
        // Predicated region
        $region41: #{tpu_custom_call.1} parent=23 // pred_check
          _
        $region42: #{tpu_custom_call.1} parent=23 // pred_check_branch
          %216 = sbr.rel target = $region44
        $region43: #{tpu_custom_call.1} parent=23 // pred_region
          %217 = sst [smem:[#allocation12]] [#allocation19]
          %218 = sst [smem:[#allocation13]] [#allocation18]
        $region44: #{tpu_custom_call.1} parent=23 // pred_fallthru
          _
        %220 = shalt.err (0)
        %s222 = sshll.u32 %s214, 4
        %s223 = int_to_ptr.vmem [resolvable:$true] %s222
        %225 = dma.hbm_to_vmem [thread:$0]  %s213, 16, %s223, [#allocation3]
        %s226 = sadd.s32 %s135, 4
        %s227 = sshra.s32 %s226, 7
        %s228 = sand.u32 %s226, 127
        %s229 = sadd.s32 %s227, %s26
        %s230 = smul.u32 %s229, 128
        %s231 = sshra.s32 %s226, 7
        %s232 = sand.u32 %s226, 127
        %s233 = sadd.s32 %s230, %s232
        %s234 = sld [smem:[#allocation5 + %s233]]
        %s235 = smul.addr %s234, 16
        %s236 = scalar_lea.hbm %s1, %s235
        %s237 = scalar_lea.vmem [#allocation2], 4
        // Predicated region
        $region45: #{tpu_custom_call.1} parent=23 // pred_check
          _
        $region46: #{tpu_custom_call.1} parent=23 // pred_check_branch
          %239 = sbr.rel target = $region48
        $region47: #{tpu_custom_call.1} parent=23 // pred_region
          %240 = sst [smem:[#allocation12]] [#allocation21]
          %241 = sst [smem:[#allocation13]] [#allocation20]
        $region48: #{tpu_custom_call.1} parent=23 // pred_fallthru
          _
        %243 = shalt.err (0)
        %s245 = sshll.u32 %s237, 4
        %s246 = int_to_ptr.vmem [resolvable:$true] %s245
        %248 = dma.hbm_to_vmem [thread:$0]  %s236, 16, %s246, [#allocation3]
        %s249 = sadd.s32 %s135, 5
        %s250 = sshra.s32 %s249, 7
        %s251 = sand.u32 %s249, 127
        %s252 = sadd.s32 %s250, %s26
        %s253 = smul.u32 %s252, 128
        %s254 = sshra.s32 %s249, 7
        %s255 = sand.u32 %s249, 127
        %s256 = sadd.s32 %s253, %s255
        %s257 = sld [smem:[#allocation5 + %s256]]
        %s258 = smul.addr %s257, 16
        %s259 = scalar_lea.hbm %s1, %s258
        %s260 = scalar_lea.vmem [#allocation2], 5
        // Predicated region
        $region49: #{tpu_custom_call.1} parent=23 // pred_check
          _
        $region50: #{tpu_custom_call.1} parent=23 // pred_check_branch
          %262 = sbr.rel target = $region52
        $region51: #{tpu_custom_call.1} parent=23 // pred_region
          %263 = sst [smem:[#allocation12]] [#allocation23]
          %264 = sst [smem:[#allocation13]] [#allocation22]
        $region52: #{tpu_custom_call.1} parent=23 // pred_fallthru
          _
        %266 = shalt.err (0)
        %s268 = sshll.u32 %s260, 4
        %s269 = int_to_ptr.vmem [resolvable:$true] %s268
        %271 = dma.hbm_to_vmem [thread:$0]  %s259, 16, %s269, [#allocation3]
        %s272 = sadd.s32 %s135, 6
        %s273 = sshra.s32 %s272, 7
        %s274 = sand.u32 %s272, 127
        %s275 = sadd.s32 %s273, %s26
        %s276 = smul.u32 %s275, 128
        %s277 = sshra.s32 %s272, 7
        %s278 = sand.u32 %s272, 127
        %s279 = sadd.s32 %s276, %s278
        %s280 = sld [smem:[#allocation5 + %s279]]
        %s281 = smul.addr %s280, 16
        %s282 = scalar_lea.hbm %s1, %s281
        %s283 = scalar_lea.vmem [#allocation2], 6
        // Predicated region
        $region53: #{tpu_custom_call.1} parent=23 // pred_check
          _
        $region54: #{tpu_custom_call.1} parent=23 // pred_check_branch
          %285 = sbr.rel target = $region56
        $region55: #{tpu_custom_call.1} parent=23 // pred_region
          %286 = sst [smem:[#allocation12]] [#allocation25]
          %287 = sst [smem:[#allocation13]] [#allocation24]
        $region56: #{tpu_custom_call.1} parent=23 // pred_fallthru
          _
        %289 = shalt.err (0)
        %s291 = sshll.u32 %s283, 4
        %s292 = int_to_ptr.vmem [resolvable:$true] %s291
        %294 = dma.hbm_to_vmem [thread:$0]  %s282, 16, %s292, [#allocation3]
        %s295 = sadd.s32 %s135, 7
        %s296 = sshra.s32 %s295, 7
        %s297 = sand.u32 %s295, 127
        %s298 = sadd.s32 %s296, %s26
        %s299 = smul.u32 %s298, 128
        %s300 = sshra.s32 %s295, 7
        %s301 = sand.u32 %s295, 127
        %s302 = sadd.s32 %s299, %s301
        %s303 = sld [smem:[#allocation5 + %s302]]
        %s304 = smul.addr %s303, 16
        %s305 = scalar_lea.hbm %s1, %s304
        %s306 = scalar_lea.vmem [#allocation2], 7
        // Predicated region
        $region57: #{tpu_custom_call.1} parent=23 // pred_check
          _
        $region58: #{tpu_custom_call.1} parent=23 // pred_check_branch
          %308 = sbr.rel target = $region60
        $region59: #{tpu_custom_call.1} parent=23 // pred_region
          %309 = sst [smem:[#allocation12]] [#allocation27]
          %310 = sst [smem:[#allocation13]] [#allocation26]
        $region60: #{tpu_custom_call.1} parent=23 // pred_fallthru
          _
        %312 = shalt.err (0)
        %s314 = sshll.u32 %s306, 4
        %s315 = int_to_ptr.vmem [resolvable:$true] %s314
        %317 = dma.hbm_to_vmem [thread:$0]  %s305, 16, %s315, [#allocation3]
        %s318 = smul.u32 1, 1
        %s319 = sshll.u32 %s318, 4
        %320 = dma.done [#allocation3], %s319
        %s321 = sshll.u32 %s318, 4
        %322 = dma.done [#allocation3], %s321
        %s323 = sshll.u32 %s318, 4
        %324 = dma.done [#allocation3], %s323
        %s325 = sshll.u32 %s318, 4
        %326 = dma.done [#allocation3], %s325
        %s327 = sshll.u32 %s318, 4
        %328 = dma.done [#allocation3], %s327
        %s329 = sshll.u32 %s318, 4
        %330 = dma.done [#allocation3], %s329
        %s331 = sshll.u32 %s318, 4
        %332 = dma.done [#allocation3], %s331
        %s333 = sshll.u32 %s318, 4
        %334 = dma.done [#allocation3], %s333
        %v335 = vld [vmem:[#allocation2] sm:$0xff]
        %v336 = vmul.f32 %v335, 11.313708
        %v337 = vld [vmem:[#allocation6] sm:$0xff]
        %v338 = vadd.f32 %v336, %v337
        %339 = vst [vmem:[%s134] sm:$0xff] %v338
        %s340 = sand.u32 %s70, 1
        %s341 = scalar_lea.sflag [#allocation8], %s340
        %s342 = sand.u32 %s70, 1
        %s343 = smul.addr %s342, 8
        %s344 = scalar_lea.vmem [#allocation9], %s343
        // Predicated region
        $region61: #{tpu_custom_call.1} parent=23 // pred_check
          %p345 = pneg %p80
        $region62: #{tpu_custom_call.1} parent=23 // pred_check_branch
          %347 = sbr.rel (%p345) target = $region64
        $region63: #{tpu_custom_call.1} parent=23 // pred_region
          %s349 = ssub.s32 128, 128
          %350 = vsyncadd %s341, %s349
          %s351 = sadd.s32 %s27, %s26
          %s352 = smul.addr %s351, 128
          %s353 = scalar_lea.hbm %s3, %s352
          %s355 = sshll.u32 %s344, 4
          %s356 = int_to_ptr.vmem [resolvable:$true] %s355
          %358 = dma.vmem_to_hbm [thread:$0]  %s356, 128, %s353, %s341
        $region64: #{tpu_custom_call.1} parent=23 // pred_fallthru
          _
      $region24: #{tpu_custom_call.1} parent=5 // pred_fallthru
        _
      %p359 = scmp.le.s32.totalorder 2, %s17
      // Predicated region
      $region65: #{tpu_custom_call.1} parent=5 // pred_check
        %p360 = pneg %p359
      $region66: #{tpu_custom_call.1} parent=5 // pred_check_branch
        %362 = sbr.rel (%p360) target = $region68
      $region67: #{tpu_custom_call.1} parent=5 // pred_region
        %s363 = ssub.s32 %s17, 2
        // Predicated region
        $region69: #{tpu_custom_call.1} parent=67 // pred_check
          %p364 = pneg %p86
        $region70: #{tpu_custom_call.1} parent=67 // pred_check_branch
          %366 = sbr.rel (%p364) target = $region72
        $region71: #{tpu_custom_call.1} parent=67 // pred_region
          %s367 = sand.u32 %s71, 1
          %s368 = scalar_lea.sflag [#allocation8], %s367
          %s369 = sand.u32 %s71, 1
          %s370 = smul.addr %s369, 8
          %s371 = scalar_lea.vmem [#allocation9], %s370
          %372 = dma.done %s368, 128
        $region72: #{tpu_custom_call.1} parent=67 // pred_fallthru
          _
      $region68: #{tpu_custom_call.1} parent=5 // pred_fallthru
        _
    $region6: #{tpu_custom_call.1} parent=1 // loop_footer
      %s21 = sadd.s32 1, %s17
    $region7: #{tpu_custom_call.1} parent=1 // loop_footer_branch
      %16 = sbr.rel target = $region3
    $region8: #{tpu_custom_call.1} parent=1 // loop_exit
      _
    %373 = vsyncpa [#allocation7], 1
    %s374 = scalar_lea.sflag [#allocation7], 1
    %375 = vsyncpa %s374, 1
    %376 = vsyncpa [#allocation8], 1
    %s377 = scalar_lea.sflag [#allocation8], 1
    %378 = vsyncpa %s377, 1
  %379 = vsyncmov [#allocation3]
  %s380 = vpop.sfrf %379
  %p381 = scmp.eq.s32.totalorder %s380, 0
  %p382 = pneg %p381
  %384 = shalt.err (%p382)

</llo_original>
